<compile_context>
chip_gen: v6e
topology: v6e:2x2x1
jax: 0.10.0
libtpu: 0.0.40
codegen_flags: <defaults>
</compile_context>

<pallas_src>
import jax
import jax.numpy as jnp
from jax.experimental import pallas as pl
from jax.experimental.pallas import tpu as pltpu


# ----------------------------------------------------------------- kernels --

def _rope_rows_kernel(t_ref, th_ref, x_ref, o_ref):
    """Rows = flattened (b, l, h); one timestamp per row.
    t_ref: (tR, 1) f32, th_ref: (1, D) f32 sign-folded thetas, x/o: (tR, D)."""
    x = x_ref[...].astype(jnp.float32)
    th = th_ref[...]                               # [-th0, +th0, -th1, +th1, ...]

    ang = t_ref[...] * th                          # (tR, D)
    cos = jnp.cos(ang)                             # EUP; cos is even -> sign drops
    sin = jnp.sin(ang)                             # EUP; already [-s, +s, ...]

    # Pair swap lane 2i <-> 2i+1: two static lane rotates (XLU) + parity select.
    # Parity comes from the sign folded into theta (even lanes negative), so no
    # iota / integer ops are needed (perf review).
    d = x.shape[-1]
    nbr_up = pltpu.roll(x, shift=d - 1, axis=1)    # lane j -> x[j + 1]
    nbr_dn = pltpu.roll(x, shift=1, axis=1)        # lane j -> x[j - 1]
    swap = jnp.where(th < 0, nbr_up, nbr_dn)       # wrap lanes never selected

    # out[2i]   = x[2i]*cos - x[2i+1]*sin
    # out[2i+1] = x[2i+1]*cos + x[2i]*sin
    o_ref[...] = (x * cos + swap * sin).astype(o_ref.dtype)


def _rope_shared_heads_kernel(t_ref, th_ref, x_ref, o_ref):
    """Head-shared variant (H >= 8): cos/sin computed once per (b, l) row and
    broadcast over the head (sublane) axis -> factor-H fewer EUP pushes.
    t_ref: (tBL, 1, 1) f32, th_ref: (1, D) f32, x/o: (tBL, H, D)."""
    x = x_ref[...].astype(jnp.float32)
    th = th_ref[...]                               # (1, D)

    ang = t_ref[...] * th[None]                    # (tBL, 1, D)
    cos = jnp.cos(ang)
    sin = jnp.sin(ang)

    d = x.shape[-1]
    nbr_up = pltpu.roll(x, shift=d - 1, axis=2)
    nbr_dn = pltpu.roll(x, shift=1, axis=2)
    swap = jnp.where((th < 0)[None], nbr_up, nbr_dn)

    o_ref[...] = (x * cos + swap * sin).astype(o_ref.dtype)


# ----------------------------------------------------------------- helpers --

def _thetas_signed(d_model, d_padded, theta=1000.0):
    """[-th0, +th0, -th1, +th1, ...], zero-padded to d_padded, shape (1, d_padded)."""
    half = jnp.arange(0, d_model, 2)[: d_model // 2].astype(jnp.float32)
    base = 1.0 / theta ** (half / d_model)          # matches precompute_thetas
    dup = jnp.repeat(base, 2)                       # pair-duplicated
    sign = jnp.tile(jnp.array([-1.0, 1.0], jnp.float32), d_model // 2)
    th = dup * sign
    if d_padded != d_model:
        th = jnp.pad(th, (0, d_padded - d_model))
    return th.reshape(1, d_padded)


def _pick_tile(n_rows, bytes_per_row, budget_bytes, align=8):
    """Rows per block: multiple of `align`, >= align, one x block <= budget.
    Does NOT need to divide n_rows — the grid uses pl.cdiv and Pallas masks
    the ragged tail (perf review: no collapse to tiny tiles, no unbounded
    fallback)."""
    cap = max(align, (budget_bytes // max(1, bytes_per_row)) // align * align)
    want = -(-n_rows // align) * align
    return min(want, cap)


def _vmem_limit(block_bytes):
    # Enough for double-buffered in/out blocks + kernel temporaries, capped to
    # stay well under v7x's 64 MiB physical VMEM.
    return int(min(48 << 20, 8 * block_bytes + (8 << 20)))


# ---------------------------------------------------------------- wrappers --

def _rope_flat_heads(x4, t, th, budget_bytes):
    """H < 8 path: flatten (B, L, H) into a single sublane-dense row axis."""
    B, L, H, D = x4.shape
    Dp = th.shape[1]
    rows = B * L * H

    x2 = x4.reshape(rows, D)                        # metadata-only reshape
    if Dp != D:
        x2 = jnp.pad(x2, ((0, 0), (0, Dp - D)))     # lane-dense guard
    t2 = jnp.repeat(t.astype(jnp.float32).reshape(B * L), H).reshape(rows, 1)

    tile = _pick_tile(rows, Dp * x4.dtype.itemsize, budget_bytes, align=8)
    blk_bytes = tile * Dp * x4.dtype.itemsize

    out2 = pl.pallas_call(
        _rope_rows_kernel,
        out_shape=jax.ShapeDtypeStruct((rows, Dp), x4.dtype),
        grid=(pl.cdiv(rows, tile),),
        in_specs=[
            pl.BlockSpec((tile, 1), lambda i: (i, 0)),   # timestamps
            pl.BlockSpec((1, Dp), lambda i: (0, 0)),     # signed thetas
            pl.BlockSpec((tile, Dp), lambda i: (i, 0)),  # activations
        ],
        out_specs=pl.BlockSpec((tile, Dp), lambda i: (i, 0)),
        compiler_params=pltpu.CompilerParams(
            dimension_semantics=("parallel",),
            vmem_limit_bytes=_vmem_limit(blk_bytes)),
    )(t2, th, x2)

    if Dp != D:
        out2 = out2[:, :D]
    return out2.reshape(B, L, H, D)


def _rope_shared_heads(x4, t, th, budget_bytes):
    """H >= 8 path: block over (B*L, H, D); cos/sin shared across heads."""
    B, L, H, D = x4.shape
    Dp = th.shape[1]
    BL = B * L

    x3 = x4.reshape(BL, H, D)                       # metadata-only reshape
    if Dp != D:
        x3 = jnp.pad(x3, ((0, 0), (0, 0), (0, Dp - D)))
    t3 = t.astype(jnp.float32).reshape(BL, 1, 1)

    tile = _pick_tile(BL, H * Dp * x4.dtype.itemsize, budget_bytes, align=8)
    blk_bytes = tile * H * Dp * x4.dtype.itemsize

    out3 = pl.pallas_call(
        _rope_shared_heads_kernel,
        out_shape=jax.ShapeDtypeStruct((BL, H, Dp), x4.dtype),
        grid=(pl.cdiv(BL, tile),),
        in_specs=[
            pl.BlockSpec((tile, 1, 1), lambda i: (i, 0, 0)),   # timestamps
            pl.BlockSpec((1, Dp), lambda i: (0, 0)),           # signed thetas
            pl.BlockSpec((tile, H, Dp), lambda i: (i, 0, 0)),  # activations
        ],
        out_specs=pl.BlockSpec((tile, H, Dp), lambda i: (i, 0, 0)),
        compiler_params=pltpu.CompilerParams(
            dimension_semantics=("parallel",),
            vmem_limit_bytes=_vmem_limit(blk_bytes)),
    )(t3, th, x3)

    if Dp != D:
        out3 = out3[:, :, :D]
    return out3.reshape(B, L, H, D)


def irregular_rope(x, t, *, theta=1000.0, budget_bytes=2 << 20):
    """x: (B, L, H, d_model) — head axis at dim 2, as the module requires.
    t: (B, L) irregular timestamps.  Returns RoPE(x, t) with x's dtype."""
    B, L, H, D = x.shape
    assert D % 2 == 0, "d_model must be even"
    assert t.shape == (B, L), "t must be (batch, seq_len)"

    Dp = -(-D // 128) * 128                         # lane-dense feature axis
    th = _thetas_signed(D, Dp, theta)
    if H >= 8:
        return _rope_shared_heads(x, t, th, budget_bytes)
    return _rope_flat_heads(x, t, th, budget_bytes)


# --------------------------------------------------------------- reference --

def _reference(x, t, theta=1000.0):
    B, L, H, D = x.shape
    thetas = 1.0 / theta ** (
        jnp.arange(0, D, 2)[: D // 2].astype(jnp.float32) / D)
    ang = t.astype(jnp.float32)[..., None] * thetas           # (B, L, D//2)
    cos = jnp.cos(ang)[:, :, None, :]
    sin = jnp.sin(ang)[:, :, None, :]
    xr = x.astype(jnp.float32).reshape(B, L, H, D // 2, 2)
    x0, x1 = xr[..., 0], xr[..., 1]
    o0 = x0 * cos - x1 * sin
    o1 = x0 * sin + x1 * cos
    return jnp.stack([o0, o1], axis=-1).reshape(B, L, H, D).astype(x.dtype)


# -------------------------------------------------------------------- main --

if __name__ == "__main__":
    key = jax.random.PRNGKey(0)
    k1, k2, k3, k4 = jax.random.split(key, 4)

    # Case 1: f32, H < 8 -> flat-row kernel (per-row cos/sin).
    B, L, H, D = 2, 8, 2, 128
    x = jax.random.normal(k1, (B, L, H, D), jnp.float32)
    dt = jax.random.uniform(k2, (B, L), jnp.float32, minval=0.1, maxval=1.5)
    t = jnp.cumsum(dt, axis=1)                      # irregular, increasing
    out = jax.block_until_ready(irregular_rope(x, t))
    ref = _reference(x, t)
    assert out.shape == x.shape
    assert jnp.allclose(out, ref, atol=1e-4, rtol=1e-4), "f32 mismatch"

    # Case 2: bf16 I/O, H >= 8 -> head-shared kernel (cos/sin once per (b, l)).
    B, L, H, D = 2, 8, 8, 128
    xb = jax.random.normal(k3, (B, L, H, D), jnp.float32).astype(jnp.bfloat16)
    dtb = jax.random.uniform(k4, (B, L), jnp.float32, minval=0.1, maxval=1.5)
    tb = jnp.cumsum(dtb, axis=1)
    outb = jax.block_until_ready(irregular_rope(xb, tb))
    refb = _reference(xb, tb)
    assert outb.shape == xb.shape
    assert jnp.allclose(outb.astype(jnp.float32), refb.astype(jnp.float32),
                        atol=3e-2, rtol=3e-2), "bf16 mismatch"

    print("KERNEL_OK")
</pallas_src>

<mosaic_0001>
module attributes {stable_mosaic.version = 11 : i64} {
  func.func @_rope_rows_kernel(%arg0: i32, %arg1: memref<32x1xf32, #tpu.memory_space<vmem>>, %arg2: memref<1x128xf32, #tpu.memory_space<vmem>>, %arg3: memref<32x128xf32, #tpu.memory_space<vmem>>, %arg4: memref<32x128xf32, #tpu.memory_space<vmem>>) attributes {dimension_semantics = [#tpu.dimension_semantics<parallel>], iteration_bounds = array<i64: 1>, scalar_prefetch = 0 : i64, scratch_operands = 0 : i64, tpu.core_type = #tpu.core_type<tc>, window_params = [{transform_indices = @transform_0, window_bounds = array<i64: 32, 1>}, {pipeline_mode = #tpu.pipeline_mode<synchronous>, transform_indices = @transform_1, window_bounds = array<i64: 1, 128>}, {transform_indices = @transform_2, window_bounds = array<i64: 32, 128>}, {transform_indices = @transform_3, window_bounds = array<i64: 32, 128>}]} {
    %c0 = arith.constant 0 : index
    %c0_0 = arith.constant 0 : index
    %0 = vector.load %arg3[%c0, %c0_0] : memref<32x128xf32, #tpu.memory_space<vmem>>, vector<32x128xf32>
    %c0_1 = arith.constant 0 : index
    %c0_2 = arith.constant 0 : index
    %1 = vector.load %arg2[%c0_1, %c0_2] : memref<1x128xf32, #tpu.memory_space<vmem>>, vector<1x128xf32>
    %c0_3 = arith.constant 0 : index
    %c0_4 = arith.constant 0 : index
    %2 = vector.load %arg1[%c0_3, %c0_4] : memref<32x1xf32, #tpu.memory_space<vmem>>, vector<32x1xf32>
    %3 = vector.broadcast %2 : vector<32x1xf32> to vector<32x128xf32>
    %4 = vector.broadcast %1 : vector<1x128xf32> to vector<32x128xf32>
    %5 = arith.mulf %3, %4 : vector<32x128xf32>
    %6 = math.cos %5 : vector<32x128xf32>
    %7 = math.sin %5 : vector<32x128xf32>
    %c127_i32 = arith.constant 127 : i32
    %8 = tpu.dynamic_rotate %0 by %c127_i32 dim 1 : vector<32x128xf32>, i32 -> vector<32x128xf32>
    %c1_i32 = arith.constant 1 : i32
    %9 = tpu.dynamic_rotate %0 by %c1_i32 dim 1 : vector<32x128xf32>, i32 -> vector<32x128xf32>
    %cst = arith.constant 0.000000e+00 : f32
    %10 = vector.broadcast %cst : f32 to vector<1x128xf32>
    %11 = arith.cmpf olt, %1, %10 : vector<1x128xf32>
    %12 = vector.shape_cast %11 : vector<1x128xi1> to vector<1x128xi1>
    %13 = vector.broadcast %12 : vector<1x128xi1> to vector<32x128xi1>
    %14 = arith.select %13, %8, %9 : vector<32x128xi1>, vector<32x128xf32>
    %15 = arith.mulf %0, %6 : vector<32x128xf32>
    %16 = arith.mulf %14, %7 : vector<32x128xf32>
    %17 = arith.addf %15, %16 : vector<32x128xf32>
    %c0_5 = arith.constant 0 : index
    %c0_6 = arith.constant 0 : index
    %18 = vector.load %arg4[%c0_5, %c0_6] : memref<32x128xf32, #tpu.memory_space<vmem>>, vector<32x128xf32>
    tpu.vector_store %arg4[%c0_5, %c0_6], %17 {strides = array<i32>} : memref<32x128xf32, #tpu.memory_space<vmem>>, vector<32x128xf32>,
    return
  }
  func.func @transform_0(%arg0: i32) -> (i32, i32) {
    %c0_i32 = arith.constant 0 : i32
    %c0_i32_0 = arith.constant 0 : i32
    return %arg0, %c0_i32 : i32, i32
  }
  func.func @transform_1(%arg0: i32) -> (i32, i32) {
    %c0_i32 = arith.constant 0 : i32
    %c0_i32_0 = arith.constant 0 : i32
    %c0_i32_1 = arith.constant 0 : i32
    return %c0_i32, %c0_i32_0 : i32, i32
  }
  func.func @transform_2(%arg0: i32) -> (i32, i32) {
    %c0_i32 = arith.constant 0 : i32
    %c0_i32_0 = arith.constant 0 : i32
    return %arg0, %c0_i32 : i32, i32
  }
  func.func @transform_3(%arg0: i32) -> (i32, i32) {
    %c0_i32 = arith.constant 0 : i32
    %c0_i32_0 = arith.constant 0 : i32
    return %arg0, %c0_i32 : i32, i32
  }
}

</mosaic_0001>

<llo_original>
// kernel: tpu_custom_call.1
$region0: #{tpu_custom_call.1}
  #allocation0 [shape = 'u32[]', space=smem, size = 0x4, offset = 0x4, fixed_abs, tag = 'smem constant byte address 0x4 - core index']
  #allocation1 [shape = 'u32[144,128]{1,0:T(1,128)}', space=vmem, size = 0x12000, scoped, tag = 'internal scratch']
  %s0 = inlined_call_operand.vmem [shape: f32[32,1], index: 0, kind: input, shape index: {}]
  %s1 = inlined_call_operand.vmem [shape: f32[1,128], index: 1, kind: input, shape index: {}]
  %s2 = inlined_call_operand.vmem [shape: f32[32,128], index: 2, kind: input, shape index: {}]
  %s3 = inlined_call_operand.hbm [shape: f32[32,128], index: 3, kind: output, shape index: {}]
  %s4 = sld [smem:[#allocation0]]
  $region22: #{tpu_custom_call.1} parent=0
    _
  %s6 = ssub.s32 1, %s4
  %s7 = scalar_select 0, %s6, %s4
  $region1: #{tpu_custom_call.1} parent=0
    #allocation2 [shape = 'u8[16384]{0}', space=vmem, size = 0x4000, scoped, tag = 'output window, operand 0, single buffered']
    #allocation3 [shape = 's32[1]{0}', space=sflag, size = 0x4, scoped, tag = 'scoped memory for tpu_custom_call.1']
    %8 = vsyncpa [#allocation3], 0
    // Predicated region
    $region2: #{tpu_custom_call.1} parent=1 // pred_check
      _
    $region3: #{tpu_custom_call.1} parent=1 // pred_check_branch
      %10 = sbr.rel (0) target = $region5
    $region4: #{tpu_custom_call.1} parent=1 // pred_region
      _
    $region5: #{tpu_custom_call.1} parent=1 // pred_fallthru
      _
    // Predicated region
    $region6: #{tpu_custom_call.1} parent=1 // pred_check
      _
    $region7: #{tpu_custom_call.1} parent=1 // pred_check_branch
      %12 = sbr.rel (0) target = $region9
    $region8: #{tpu_custom_call.1} parent=1 // pred_region
      _
    $region9: #{tpu_custom_call.1} parent=1 // pred_fallthru
      _
    // Predicated region
    $region10: #{tpu_custom_call.1} parent=1 // pred_check
      _
    $region11: #{tpu_custom_call.1} parent=1 // pred_check_branch
      %14 = sbr.rel (0) target = $region13
    $region12: #{tpu_custom_call.1} parent=1 // pred_region
      _
    $region13: #{tpu_custom_call.1} parent=1 // pred_fallthru
      _
    %v15 = vld [vmem:[%s2] sm:$0xff]
    %v16 = vld [vmem:[%s2 + $0x8] sm:$0xff]
    %v17 = vld [vmem:[%s2 + $0x10] sm:$0xff]
    %v18 = vld [vmem:[%s2 + $0x18] sm:$0xff]
    %v19 = vld [vmem:[%s1] sm:$0x1]
    %v20 = vld [vmem:[%s0] sm:$0xff]
    %v21 = vld [vmem:[%s0 + $0x8] sm:$0xff]
    %v22 = vld [vmem:[%s0 + $0x10] sm:$0xff]
    %v23 = vld [vmem:[%s0 + $0x18] sm:$0xff]
    %25 = vset.pattern.permute.xlu0 0
    %26 = vperm.xlu0 %25, %v20
    %v27 = vpop.permute.xlu0 %26
    %30 = vset.pattern.permute.xlu0 0
    %31 = vperm.xlu0 %30, %v21
    %v32 = vpop.permute.xlu0 %31
    %35 = vset.pattern.permute.xlu0 0
    %36 = vperm.xlu0 %35, %v22
    %v37 = vpop.permute.xlu0 %36
    %40 = vset.pattern.permute.xlu0 0
    %41 = vperm.xlu0 %40, %v23
    %v42 = vpop.permute.xlu0 %41
    %v45 = vlaneseq
    %v46 = vshrl.u32 %v45, 7
    %v47 = vsub.s32 0, %v46
    %v48 = vrot.slane %v19, %v47
    %v50 = vmul.f32 %v27, %v48
    %v51 = vmul.f32 %v32, %v48
    %v52 = vmul.f32 %v37, %v48
    %v53 = vmul.f32 %v42, %v48
    %v54 = vand.u32 2147483647, %v50
    %vm55 = vcmp.le.f32.partialorder %v54, 0.7853982
    %vm56 = vcmp.lt.s32.totalorder %v50, 0
    %v57 = vand.u32 %v50, 2139095040
    %v58 = vshrl.u32 %v57, 23
    %v59 = vsub.s32 %v58, 127
    %v60 = vand.u32 2147483647, %v50
    %v61 = vand.u32 %v60, 8388607
    %v62 = vor.u32 %v61, 8388608
    %v63 = vsub.s32 0, %v62
    %v64 = vadd.s32 %v59, 1
    %vm65 = vcmp.gt.s32.totalorder %v64, 0
    %v66 = vsel %vm65, %v64, 0
    %v67 = vshrl.u32 %v66, 5
    %v68 = vand.u32 %v66, 31
    %v69 = vsub.s32 32, %v68
    %v70 = vshrl.u32 683565275, %v69
    %v71 = vshll.u32 683565275, %v68
    %v72 = vshrl.u32 2475754826, %v69
    %v73 = vor.u32 %v71, %v72
    %v74 = vshll.u32 2475754826, %v68
    %v75 = vshrl.u32 2131351028, %v69
    %v76 = vor.u32 %v74, %v75
    %v77 = vshll.u32 2131351028, %v68
    %v78 = vshrl.u32 2102212464, %v69
    %v79 = vor.u32 %v77, %v78
    %v80 = vshll.u32 2102212464, %v68
    %v81 = vshrl.u32 920167782, %v69
    %v82 = vor.u32 %v80, %v81
    %v83 = vshll.u32 920167782, %v68
    %v84 = vshrl.u32 1326507024, %v69
    %v85 = vor.u32 %v83, %v84
    %vm86 = vcmp.lt.s32.totalorder %v67, 1
    %vm87 = vcmp.lt.s32.totalorder %v67, 2
    %vm88 = vcmp.lt.s32.totalorder %v67, 3
    %vm89 = vcmp.lt.s32.totalorder %v67, 4
    %v90 = vsel %vm86, %v70, %v73
    %v91 = vsel %vm89, %v79, 2102212464
    %v92 = vsel %vm88, %v76, %v91
    %v93 = vsel %vm87, %v90, %v92
    %v94 = vsel %vm86, %v73, %v76
    %v95 = vsel %vm89, %v82, 920167782
    %v96 = vsel %vm88, %v79, %v95
    %v97 = vsel %vm87, %v94, %v96
    %v98 = vsel %vm86, %v76, %v79
    %v99 = vsel %vm89, %v85, 1326507024
    %v100 = vsel %vm88, %v82, %v99
    %v101 = vsel %vm87, %v98, %v100
    %v102 = vshll.u32 %v62, 8
    %v103 = vmul.u32.u64.compose %v102, %v101
    %v104 = vextract.low.u32 %v103
    %v105 = vextract.high.u32 %v103
    %v106 = vmul.u32.u64.compose %v102, %v97
    %v107 = vextract.low.u32 %v106
    %v108 = vextract.high.u32 %v106
    %v109 = vmul.u32 %v102, %v93
    %v110 = vadd.s32 %v105, %v107
    %vm111 = vc.u32 %v105, %v107
    %v112 = vadd.s32 %v108, 1
    %v113 = vsel %vm111, %v112, %v108
    %v114 = vadd.s32 %v109, %v113
    %v115 = vadd.s32 %v114, 536870912
    %v116 = vshrl.u32 %v115, 30
    %v117 = vshll.u32 %v116, 30
    %v118 = vsub.s32 %v114, %v117
    %vm119 = vcmp.lt.s32.totalorder %v118, 0
    %v120 = vsub.s32 0, %v118
    %v121 = vsel %vm119, %v120, %v118
    %v122 = vclz %v121
    %v123 = vsub.s32 %v122, 2
    %vm124 = vcmp.gt.s32.totalorder 0, %v123
    %v125 = vsel %vm124, 0, %v123
    %v126 = vsub.s32 32, %v125
    %v127 = vshll.u32 %v118, %v125
    %v128 = vshrl.u32 %v110, %v126
    %v129 = vor.u32 %v127, %v128
    %v130 = vsub.s32 4294967266, %v125
    %v131 = vadd.s32 %v130, 127
    %v132 = vshll.u32 %v131, 23
    %v133 = vor.u32 4788187, %v132
    %v134 = vand.u32 2147483647, %v133
    %v136 = vcvt.s32.f32 %v129
    %v137 = vmul.f32 %v136, %v134
    %v138 = vxor.u32 %v137, 2147483648
    %v139 = vsel %vm56, %v138, %v137
    %v140 = vsub.s32 4, %v116
    %v141 = vsel %vm56, %v140, %v116
    %v142 = vsel %vm55, %v50, %v139
    %v143 = vsel %vm55, 0, %v141
    %v144 = vcosq.f32.pop %v142
    %v145 = vsinq.f32.pop %v142
    %vm146 = vweird.f32 %v50
    %v147 = vand.u32 %v143, 3
    %vm148 = vcmp.lt.s32.totalorder %v147, 2
    %vm149 = vcmp.eq.s32.totalorder %v147, 0
    %v150 = vxor.u32 %v145, 2147483648
    %v151 = vsel %vm149, %v144, %v150
    %vm152 = vcmp.eq.s32.totalorder %v147, 2
    %v153 = vxor.u32 %v144, 2147483648
    %v154 = vsel %vm152, %v153, %v145
    %v155 = vsel %vm148, %v151, %v154
    %v156 = vsel %vm146, nan, %v155
    %v157 = vand.u32 2147483647, %v51
    %vm158 = vcmp.le.f32.partialorder %v157, 0.7853982
    %vm159 = vcmp.lt.s32.totalorder %v51, 0
    %v160 = vand.u32 %v51, 2139095040
    %v161 = vshrl.u32 %v160, 23
    %v162 = vsub.s32 %v161, 127
    %v163 = vand.u32 2147483647, %v51
    %v164 = vand.u32 %v163, 8388607
    %v165 = vor.u32 %v164, 8388608
    %v166 = vsub.s32 0, %v165
    %v167 = vadd.s32 %v162, 1
    %vm168 = vcmp.gt.s32.totalorder %v167, 0
    %v169 = vsel %vm168, %v167, 0
    %v170 = vshrl.u32 %v169, 5
    %v171 = vand.u32 %v169, 31
    %v172 = vsub.s32 32, %v171
    %v173 = vshrl.u32 683565275, %v172
    %v174 = vshll.u32 683565275, %v171
    %v175 = vshrl.u32 2475754826, %v172
    %v176 = vor.u32 %v174, %v175
    %v177 = vshll.u32 2475754826, %v171
    %v178 = vshrl.u32 2131351028, %v172
    %v179 = vor.u32 %v177, %v178
    %v180 = vshll.u32 2131351028, %v171
    %v181 = vshrl.u32 2102212464, %v172
    %v182 = vor.u32 %v180, %v181
    %v183 = vshll.u32 2102212464, %v171
    %v184 = vshrl.u32 920167782, %v172
    %v185 = vor.u32 %v183, %v184
    %v186 = vshll.u32 920167782, %v171
    %v187 = vshrl.u32 1326507024, %v172
    %v188 = vor.u32 %v186, %v187
    %vm189 = vcmp.lt.s32.totalorder %v170, 1
    %vm190 = vcmp.lt.s32.totalorder %v170, 2
    %vm191 = vcmp.lt.s32.totalorder %v170, 3
    %vm192 = vcmp.lt.s32.totalorder %v170, 4
    %v193 = vsel %vm189, %v173, %v176
    %v194 = vsel %vm192, %v182, 2102212464
    %v195 = vsel %vm191, %v179, %v194
    %v196 = vsel %vm190, %v193, %v195
    %v197 = vsel %vm189, %v176, %v179
    %v198 = vsel %vm192, %v185, 920167782
    %v199 = vsel %vm191, %v182, %v198
    %v200 = vsel %vm190, %v197, %v199
    %v201 = vsel %vm189, %v179, %v182
    %v202 = vsel %vm192, %v188, 1326507024
    %v203 = vsel %vm191, %v185, %v202
    %v204 = vsel %vm190, %v201, %v203
    %v205 = vshll.u32 %v165, 8
    %v206 = vmul.u32.u64.compose %v205, %v204
    %v207 = vextract.low.u32 %v206
    %v208 = vextract.high.u32 %v206
    %v209 = vmul.u32.u64.compose %v205, %v200
    %v210 = vextract.low.u32 %v209
    %v211 = vextract.high.u32 %v209
    %v212 = vmul.u32 %v205, %v196
    %v213 = vadd.s32 %v208, %v210
    %vm214 = vc.u32 %v208, %v210
    %v215 = vadd.s32 %v211, 1
    %v216 = vsel %vm214, %v215, %v211
    %v217 = vadd.s32 %v212, %v216
    %v218 = vadd.s32 %v217, 536870912
    %v219 = vshrl.u32 %v218, 30
    %v220 = vshll.u32 %v219, 30
    %v221 = vsub.s32 %v217, %v220
    %vm222 = vcmp.lt.s32.totalorder %v221, 0
    %v223 = vsub.s32 0, %v221
    %v224 = vsel %vm222, %v223, %v221
    %v225 = vclz %v224
    %v226 = vsub.s32 %v225, 2
    %vm227 = vcmp.gt.s32.totalorder 0, %v226
    %v228 = vsel %vm227, 0, %v226
    %v229 = vsub.s32 32, %v228
    %v230 = vshll.u32 %v221, %v228
    %v231 = vshrl.u32 %v213, %v229
    %v232 = vor.u32 %v230, %v231
    %v233 = vsub.s32 4294967266, %v228
    %v234 = vadd.s32 %v233, 127
    %v235 = vshll.u32 %v234, 23
    %v236 = vor.u32 4788187, %v235
    %v237 = vand.u32 2147483647, %v236
    %v239 = vcvt.s32.f32 %v232
    %v240 = vmul.f32 %v239, %v237
    %v241 = vxor.u32 %v240, 2147483648
    %v242 = vsel %vm159, %v241, %v240
    %v243 = vsub.s32 4, %v219
    %v244 = vsel %vm159, %v243, %v219
    %v245 = vsel %vm158, %v51, %v242
    %v246 = vsel %vm158, 0, %v244
    %v247 = vcosq.f32.pop %v245
    %v248 = vsinq.f32.pop %v245
    %vm249 = vweird.f32 %v51
    %v250 = vand.u32 %v246, 3
    %vm251 = vcmp.lt.s32.totalorder %v250, 2
    %vm252 = vcmp.eq.s32.totalorder %v250, 0
    %v253 = vxor.u32 %v248, 2147483648
    %v254 = vsel %vm252, %v247, %v253
    %vm255 = vcmp.eq.s32.totalorder %v250, 2
    %v256 = vxor.u32 %v247, 2147483648
    %v257 = vsel %vm255, %v256, %v248
    %v258 = vsel %vm251, %v254, %v257
    %v259 = vsel %vm249, nan, %v258
    %v260 = vand.u32 2147483647, %v52
    %vm261 = vcmp.le.f32.partialorder %v260, 0.7853982
    %vm262 = vcmp.lt.s32.totalorder %v52, 0
    %v263 = vand.u32 %v52, 2139095040
    %v264 = vshrl.u32 %v263, 23
    %v265 = vsub.s32 %v264, 127
    %v266 = vand.u32 2147483647, %v52
    %v267 = vand.u32 %v266, 8388607
    %v268 = vor.u32 %v267, 8388608
    %v269 = vsub.s32 0, %v268
    %v270 = vadd.s32 %v265, 1
    %vm271 = vcmp.gt.s32.totalorder %v270, 0
    %v272 = vsel %vm271, %v270, 0
    %v273 = vshrl.u32 %v272, 5
    %v274 = vand.u32 %v272, 31
    %v275 = vsub.s32 32, %v274
    %v276 = vshrl.u32 683565275, %v275
    %v277 = vshll.u32 683565275, %v274
    %v278 = vshrl.u32 2475754826, %v275
    %v279 = vor.u32 %v277, %v278
    %v280 = vshll.u32 2475754826, %v274
    %v281 = vshrl.u32 2131351028, %v275
    %v282 = vor.u32 %v280, %v281
    %v283 = vshll.u32 2131351028, %v274
    %v284 = vshrl.u32 2102212464, %v275
    %v285 = vor.u32 %v283, %v284
    %v286 = vshll.u32 2102212464, %v274
    %v287 = vshrl.u32 920167782, %v275
    %v288 = vor.u32 %v286, %v287
    %v289 = vshll.u32 920167782, %v274
    %v290 = vshrl.u32 1326507024, %v275
    %v291 = vor.u32 %v289, %v290
    %vm292 = vcmp.lt.s32.totalorder %v273, 1
    %vm293 = vcmp.lt.s32.totalorder %v273, 2
    %vm294 = vcmp.lt.s32.totalorder %v273, 3
    %vm295 = vcmp.lt.s32.totalorder %v273, 4
    %v296 = vsel %vm292, %v276, %v279
    %v297 = vsel %vm295, %v285, 2102212464
    %v298 = vsel %vm294, %v282, %v297
    %v299 = vsel %vm293, %v296, %v298
    %v300 = vsel %vm292, %v279, %v282
    %v301 = vsel %vm295, %v288, 920167782
    %v302 = vsel %vm294, %v285, %v301
    %v303 = vsel %vm293, %v300, %v302
    %v304 = vsel %vm292, %v282, %v285
    %v305 = vsel %vm295, %v291, 1326507024
    %v306 = vsel %vm294, %v288, %v305
    %v307 = vsel %vm293, %v304, %v306
    %v308 = vshll.u32 %v268, 8
    %v309 = vmul.u32.u64.compose %v308, %v307
    %v310 = vextract.low.u32 %v309
    %v311 = vextract.high.u32 %v309
    %v312 = vmul.u32.u64.compose %v308, %v303
    %v313 = vextract.low.u32 %v312
    %v314 = vextract.high.u32 %v312
    %v315 = vmul.u32 %v308, %v299
    %v316 = vadd.s32 %v311, %v313
    %vm317 = vc.u32 %v311, %v313
    %v318 = vadd.s32 %v314, 1
    %v319 = vsel %vm317, %v318, %v314
    %v320 = vadd.s32 %v315, %v319
    %v321 = vadd.s32 %v320, 536870912
    %v322 = vshrl.u32 %v321, 30
    %v323 = vshll.u32 %v322, 30
    %v324 = vsub.s32 %v320, %v323
    %vm325 = vcmp.lt.s32.totalorder %v324, 0
    %v326 = vsub.s32 0, %v324
    %v327 = vsel %vm325, %v326, %v324
    %v328 = vclz %v327
    %v329 = vsub.s32 %v328, 2
    %vm330 = vcmp.gt.s32.totalorder 0, %v329
    %v331 = vsel %vm330, 0, %v329
    %v332 = vsub.s32 32, %v331
    %v333 = vshll.u32 %v324, %v331
    %v334 = vshrl.u32 %v316, %v332
    %v335 = vor.u32 %v333, %v334
    %v336 = vsub.s32 4294967266, %v331
    %v337 = vadd.s32 %v336, 127
    %v338 = vshll.u32 %v337, 23
    %v339 = vor.u32 4788187, %v338
    %v340 = vand.u32 2147483647, %v339
    %v342 = vcvt.s32.f32 %v335
    %v343 = vmul.f32 %v342, %v340
    %v344 = vxor.u32 %v343, 2147483648
    %v345 = vsel %vm262, %v344, %v343
    %v346 = vsub.s32 4, %v322
    %v347 = vsel %vm262, %v346, %v322
    %v348 = vsel %vm261, %v52, %v345
    %v349 = vsel %vm261, 0, %v347
    %v350 = vcosq.f32.pop %v348
    %v351 = vsinq.f32.pop %v348
    %vm352 = vweird.f32 %v52
    %v353 = vand.u32 %v349, 3
    %vm354 = vcmp.lt.s32.totalorder %v353, 2
    %vm355 = vcmp.eq.s32.totalorder %v353, 0
    %v356 = vxor.u32 %v351, 2147483648
    %v357 = vsel %vm355, %v350, %v356
    %vm358 = vcmp.eq.s32.totalorder %v353, 2
    %v359 = vxor.u32 %v350, 2147483648
    %v360 = vsel %vm358, %v359, %v351
    %v361 = vsel %vm354, %v357, %v360
    %v362 = vsel %vm352, nan, %v361
    %v363 = vand.u32 2147483647, %v53
    %vm364 = vcmp.le.f32.partialorder %v363, 0.7853982
    %vm365 = vcmp.lt.s32.totalorder %v53, 0
    %v366 = vand.u32 %v53, 2139095040
    %v367 = vshrl.u32 %v366, 23
    %v368 = vsub.s32 %v367, 127
    %v369 = vand.u32 2147483647, %v53
    %v370 = vand.u32 %v369, 8388607
    %v371 = vor.u32 %v370, 8388608
    %v372 = vsub.s32 0, %v371
    %v373 = vadd.s32 %v368, 1
    %vm374 = vcmp.gt.s32.totalorder %v373, 0
    %v375 = vsel %vm374, %v373, 0
    %v376 = vshrl.u32 %v375, 5
    %v377 = vand.u32 %v375, 31
    %v378 = vsub.s32 32, %v377
    %v379 = vshrl.u32 683565275, %v378
    %v380 = vshll.u32 683565275, %v377
    %v381 = vshrl.u32 2475754826, %v378
    %v382 = vor.u32 %v380, %v381
    %v383 = vshll.u32 2475754826, %v377
    %v384 = vshrl.u32 2131351028, %v378
    %v385 = vor.u32 %v383, %v384
    %v386 = vshll.u32 2131351028, %v377
    %v387 = vshrl.u32 2102212464, %v378
    %v388 = vor.u32 %v386, %v387
    %v389 = vshll.u32 2102212464, %v377
    %v390 = vshrl.u32 920167782, %v378
    %v391 = vor.u32 %v389, %v390
    %v392 = vshll.u32 920167782, %v377
    %v393 = vshrl.u32 1326507024, %v378
    %v394 = vor.u32 %v392, %v393
    %vm395 = vcmp.lt.s32.totalorder %v376, 1
    %vm396 = vcmp.lt.s32.totalorder %v376, 2
    %vm397 = vcmp.lt.s32.totalorder %v376, 3
    %vm398 = vcmp.lt.s32.totalorder %v376, 4
    %v399 = vsel %vm395, %v379, %v382
    %v400 = vsel %vm398, %v388, 2102212464
    %v401 = vsel %vm397, %v385, %v400
    %v402 = vsel %vm396, %v399, %v401
    %v403 = vsel %vm395, %v382, %v385
    %v404 = vsel %vm398, %v391, 920167782
    %v405 = vsel %vm397, %v388, %v404
    %v406 = vsel %vm396, %v403, %v405
    %v407 = vsel %vm395, %v385, %v388
    %v408 = vsel %vm398, %v394, 1326507024
    %v409 = vsel %vm397, %v391, %v408
    %v410 = vsel %vm396, %v407, %v409
    %v411 = vshll.u32 %v371, 8
    %v412 = vmul.u32.u64.compose %v411, %v410
    %v413 = vextract.low.u32 %v412
    %v414 = vextract.high.u32 %v412
    %v415 = vmul.u32.u64.compose %v411, %v406
    %v416 = vextract.low.u32 %v415
    %v417 = vextract.high.u32 %v415
    %v418 = vmul.u32 %v411, %v402
    %v419 = vadd.s32 %v414, %v416
    %vm420 = vc.u32 %v414, %v416
    %v421 = vadd.s32 %v417, 1
    %v422 = vsel %vm420, %v421, %v417
    %v423 = vadd.s32 %v418, %v422
    %v424 = vadd.s32 %v423, 536870912
    %v425 = vshrl.u32 %v424, 30
    %v426 = vshll.u32 %v425, 30
    %v427 = vsub.s32 %v423, %v426
    %vm428 = vcmp.lt.s32.totalorder %v427, 0
    %v429 = vsub.s32 0, %v427
    %v430 = vsel %vm428, %v429, %v427
    %v431 = vclz %v430
    %v432 = vsub.s32 %v431, 2
    %vm433 = vcmp.gt.s32.totalorder 0, %v432
    %v434 = vsel %vm433, 0, %v432
    %v435 = vsub.s32 32, %v434
    %v436 = vshll.u32 %v427, %v434
    %v437 = vshrl.u32 %v419, %v435
    %v438 = vor.u32 %v436, %v437
    %v439 = vsub.s32 4294967266, %v434
    %v440 = vadd.s32 %v439, 127
    %v441 = vshll.u32 %v440, 23
    %v442 = vor.u32 4788187, %v441
    %v443 = vand.u32 2147483647, %v442
    %v445 = vcvt.s32.f32 %v438
    %v446 = vmul.f32 %v445, %v443
    %v447 = vxor.u32 %v446, 2147483648
    %v448 = vsel %vm365, %v447, %v446
    %v449 = vsub.s32 4, %v425
    %v450 = vsel %vm365, %v449, %v425
    %v451 = vsel %vm364, %v53, %v448
    %v452 = vsel %vm364, 0, %v450
    %v453 = vcosq.f32.pop %v451
    %v454 = vsinq.f32.pop %v451
    %vm455 = vweird.f32 %v53
    %v456 = vand.u32 %v452, 3
    %vm457 = vcmp.lt.s32.totalorder %v456, 2
    %vm458 = vcmp.eq.s32.totalorder %v456, 0
    %v459 = vxor.u32 %v454, 2147483648
    %v460 = vsel %vm458, %v453, %v459
    %vm461 = vcmp.eq.s32.totalorder %v456, 2
    %v462 = vxor.u32 %v453, 2147483648
    %v463 = vsel %vm461, %v462, %v454
    %v464 = vsel %vm457, %v460, %v463
    %v465 = vsel %vm455, nan, %v464
    %v466 = vand.u32 2147483647, %v50
    %vm467 = vcmp.le.f32.partialorder %v466, 0.7853982
    %vm468 = vcmp.lt.s32.totalorder %v50, 0
    %v469 = vand.u32 %v50, 2139095040
    %v470 = vshrl.u32 %v469, 23
    %v471 = vsub.s32 %v470, 127
    %v472 = vand.u32 2147483647, %v50
    %v473 = vand.u32 %v472, 8388607
    %v474 = vor.u32 %v473, 8388608
    %v475 = vsub.s32 0, %v474
    %v476 = vadd.s32 %v471, 1
    %vm477 = vcmp.gt.s32.totalorder %v476, 0
    %v478 = vsel %vm477, %v476, 0
    %v479 = vshrl.u32 %v478, 5
    %v480 = vand.u32 %v478, 31
    %v481 = vsub.s32 32, %v480
    %v482 = vshrl.u32 683565275, %v481
    %v483 = vshll.u32 683565275, %v480
    %v484 = vshrl.u32 2475754826, %v481
    %v485 = vor.u32 %v483, %v484
    %v486 = vshll.u32 2475754826, %v480
    %v487 = vshrl.u32 2131351028, %v481
    %v488 = vor.u32 %v486, %v487
    %v489 = vshll.u32 2131351028, %v480
    %v490 = vshrl.u32 2102212464, %v481
    %v491 = vor.u32 %v489, %v490
    %v492 = vshll.u32 2102212464, %v480
    %v493 = vshrl.u32 920167782, %v481
    %v494 = vor.u32 %v492, %v493
    %v495 = vshll.u32 920167782, %v480
    %v496 = vshrl.u32 1326507024, %v481
    %v497 = vor.u32 %v495, %v496
    %vm498 = vcmp.lt.s32.totalorder %v479, 1
    %vm499 = vcmp.lt.s32.totalorder %v479, 2
    %vm500 = vcmp.lt.s32.totalorder %v479, 3
    %vm501 = vcmp.lt.s32.totalorder %v479, 4
    %v502 = vsel %vm498, %v482, %v485
    %v503 = vsel %vm501, %v491, 2102212464
    %v504 = vsel %vm500, %v488, %v503
    %v505 = vsel %vm499, %v502, %v504
    %v506 = vsel %vm498, %v485, %v488
    %v507 = vsel %vm501, %v494, 920167782
    %v508 = vsel %vm500, %v491, %v507
    %v509 = vsel %vm499, %v506, %v508
    %v510 = vsel %vm498, %v488, %v491
    %v511 = vsel %vm501, %v497, 1326507024
    %v512 = vsel %vm500, %v494, %v511
    %v513 = vsel %vm499, %v510, %v512
    %v514 = vshll.u32 %v474, 8
    %v515 = vmul.u32.u64.compose %v514, %v513
    %v516 = vextract.low.u32 %v515
    %v517 = vextract.high.u32 %v515
    %v518 = vmul.u32.u64.compose %v514, %v509
    %v519 = vextract.low.u32 %v518
    %v520 = vextract.high.u32 %v518
    %v521 = vmul.u32 %v514, %v505
    %v522 = vadd.s32 %v517, %v519
    %vm523 = vc.u32 %v517, %v519
    %v524 = vadd.s32 %v520, 1
    %v525 = vsel %vm523, %v524, %v520
    %v526 = vadd.s32 %v521, %v525
    %v527 = vadd.s32 %v526, 536870912
    %v528 = vshrl.u32 %v527, 30
    %v529 = vshll.u32 %v528, 30
    %v530 = vsub.s32 %v526, %v529
    %vm531 = vcmp.lt.s32.totalorder %v530, 0
    %v532 = vsub.s32 0, %v530
    %v533 = vsel %vm531, %v532, %v530
    %v534 = vclz %v533
    %v535 = vsub.s32 %v534, 2
    %vm536 = vcmp.gt.s32.totalorder 0, %v535
    %v537 = vsel %vm536, 0, %v535
    %v538 = vsub.s32 32, %v537
    %v539 = vshll.u32 %v530, %v537
    %v540 = vshrl.u32 %v522, %v538
    %v541 = vor.u32 %v539, %v540
    %v542 = vsub.s32 4294967266, %v537
    %v543 = vadd.s32 %v542, 127
    %v544 = vshll.u32 %v543, 23
    %v545 = vor.u32 4788187, %v544
    %v546 = vand.u32 2147483647, %v545
    %v548 = vcvt.s32.f32 %v541
    %v549 = vmul.f32 %v548, %v546
    %v550 = vxor.u32 %v549, 2147483648
    %v551 = vsel %vm468, %v550, %v549
    %v552 = vsub.s32 4, %v528
    %v553 = vsel %vm468, %v552, %v528
    %v554 = vsel %vm467, %v50, %v551
    %v555 = vsel %vm467, 0, %v553
    %v556 = vcosq.f32.pop %v554
    %v557 = vsinq.f32.pop %v554
    %vm558 = vweird.f32 %v50
    %v559 = vadd.s32 %v555, 3
    %v560 = vand.u32 %v559, 3
    %vm561 = vcmp.lt.s32.totalorder %v560, 2
    %vm562 = vcmp.eq.s32.totalorder %v560, 0
    %v563 = vxor.u32 %v557, 2147483648
    %v564 = vsel %vm562, %v556, %v563
    %vm565 = vcmp.eq.s32.totalorder %v560, 2
    %v566 = vxor.u32 %v556, 2147483648
    %v567 = vsel %vm565, %v566, %v557
    %v568 = vsel %vm561, %v564, %v567
    %v569 = vsel %vm558, nan, %v568
    %v570 = vand.u32 2147483647, %v51
    %vm571 = vcmp.le.f32.partialorder %v570, 0.7853982
    %vm572 = vcmp.lt.s32.totalorder %v51, 0
    %v573 = vand.u32 %v51, 2139095040
    %v574 = vshrl.u32 %v573, 23
    %v575 = vsub.s32 %v574, 127
    %v576 = vand.u32 2147483647, %v51
    %v577 = vand.u32 %v576, 8388607
    %v578 = vor.u32 %v577, 8388608
    %v579 = vsub.s32 0, %v578
    %v580 = vadd.s32 %v575, 1
    %vm581 = vcmp.gt.s32.totalorder %v580, 0
    %v582 = vsel %vm581, %v580, 0
    %v583 = vshrl.u32 %v582, 5
    %v584 = vand.u32 %v582, 31
    %v585 = vsub.s32 32, %v584
    %v586 = vshrl.u32 683565275, %v585
    %v587 = vshll.u32 683565275, %v584
    %v588 = vshrl.u32 2475754826, %v585
    %v589 = vor.u32 %v587, %v588
    %v590 = vshll.u32 2475754826, %v584
    %v591 = vshrl.u32 2131351028, %v585
    %v592 = vor.u32 %v590, %v591
    %v593 = vshll.u32 2131351028, %v584
    %v594 = vshrl.u32 2102212464, %v585
    %v595 = vor.u32 %v593, %v594
    %v596 = vshll.u32 2102212464, %v584
    %v597 = vshrl.u32 920167782, %v585
    %v598 = vor.u32 %v596, %v597
    %v599 = vshll.u32 920167782, %v584
    %v600 = vshrl.u32 1326507024, %v585
    %v601 = vor.u32 %v599, %v600
    %vm602 = vcmp.lt.s32.totalorder %v583, 1
    %vm603 = vcmp.lt.s32.totalorder %v583, 2
    %vm604 = vcmp.lt.s32.totalorder %v583, 3
    %vm605 = vcmp.lt.s32.totalorder %v583, 4
    %v606 = vsel %vm602, %v586, %v589
    %v607 = vsel %vm605, %v595, 2102212464
    %v608 = vsel %vm604, %v592, %v607
    %v609 = vsel %vm603, %v606, %v608
    %v610 = vsel %vm602, %v589, %v592
    %v611 = vsel %vm605, %v598, 920167782
    %v612 = vsel %vm604, %v595, %v611
    %v613 = vsel %vm603, %v610, %v612
    %v614 = vsel %vm602, %v592, %v595
    %v615 = vsel %vm605, %v601, 1326507024
    %v616 = vsel %vm604, %v598, %v615
    %v617 = vsel %vm603, %v614, %v616
    %v618 = vshll.u32 %v578, 8
    %v619 = vmul.u32.u64.compose %v618, %v617
    %v620 = vextract.low.u32 %v619
    %v621 = vextract.high.u32 %v619
    %v622 = vmul.u32.u64.compose %v618, %v613
    %v623 = vextract.low.u32 %v622
    %v624 = vextract.high.u32 %v622
    %v625 = vmul.u32 %v618, %v609
    %v626 = vadd.s32 %v621, %v623
    %vm627 = vc.u32 %v621, %v623
    %v628 = vadd.s32 %v624, 1
    %v629 = vsel %vm627, %v628, %v624
    %v630 = vadd.s32 %v625, %v629
    %v631 = vadd.s32 %v630, 536870912
    %v632 = vshrl.u32 %v631, 30
    %v633 = vshll.u32 %v632, 30
    %v634 = vsub.s32 %v630, %v633
    %vm635 = vcmp.lt.s32.totalorder %v634, 0
    %v636 = vsub.s32 0, %v634
    %v637 = vsel %vm635, %v636, %v634
    %v638 = vclz %v637
    %v639 = vsub.s32 %v638, 2
    %vm640 = vcmp.gt.s32.totalorder 0, %v639
    %v641 = vsel %vm640, 0, %v639
    %v642 = vsub.s32 32, %v641
    %v643 = vshll.u32 %v634, %v641
    %v644 = vshrl.u32 %v626, %v642
    %v645 = vor.u32 %v643, %v644
    %v646 = vsub.s32 4294967266, %v641
    %v647 = vadd.s32 %v646, 127
    %v648 = vshll.u32 %v647, 23
    %v649 = vor.u32 4788187, %v648
    %v650 = vand.u32 2147483647, %v649
    %v652 = vcvt.s32.f32 %v645
    %v653 = vmul.f32 %v652, %v650
    %v654 = vxor.u32 %v653, 2147483648
    %v655 = vsel %vm572, %v654, %v653
    %v656 = vsub.s32 4, %v632
    %v657 = vsel %vm572, %v656, %v632
    %v658 = vsel %vm571, %v51, %v655
    %v659 = vsel %vm571, 0, %v657
    %v660 = vcosq.f32.pop %v658
    %v661 = vsinq.f32.pop %v658
    %vm662 = vweird.f32 %v51
    %v663 = vadd.s32 %v659, 3
    %v664 = vand.u32 %v663, 3
    %vm665 = vcmp.lt.s32.totalorder %v664, 2
    %vm666 = vcmp.eq.s32.totalorder %v664, 0
    %v667 = vxor.u32 %v661, 2147483648
    %v668 = vsel %vm666, %v660, %v667
    %vm669 = vcmp.eq.s32.totalorder %v664, 2
    %v670 = vxor.u32 %v660, 2147483648
    %v671 = vsel %vm669, %v670, %v661
    %v672 = vsel %vm665, %v668, %v671
    %v673 = vsel %vm662, nan, %v672
    %v674 = vand.u32 2147483647, %v52
    %vm675 = vcmp.le.f32.partialorder %v674, 0.7853982
    %vm676 = vcmp.lt.s32.totalorder %v52, 0
    %v677 = vand.u32 %v52, 2139095040
    %v678 = vshrl.u32 %v677, 23
    %v679 = vsub.s32 %v678, 127
    %v680 = vand.u32 2147483647, %v52
    %v681 = vand.u32 %v680, 8388607
    %v682 = vor.u32 %v681, 8388608
    %v683 = vsub.s32 0, %v682
    %v684 = vadd.s32 %v679, 1
    %vm685 = vcmp.gt.s32.totalorder %v684, 0
    %v686 = vsel %vm685, %v684, 0
    %v687 = vshrl.u32 %v686, 5
    %v688 = vand.u32 %v686, 31
    %v689 = vsub.s32 32, %v688
    %v690 = vshrl.u32 683565275, %v689
    %v691 = vshll.u32 683565275, %v688
    %v692 = vshrl.u32 2475754826, %v689
    %v693 = vor.u32 %v691, %v692
    %v694 = vshll.u32 2475754826, %v688
    %v695 = vshrl.u32 2131351028, %v689
    %v696 = vor.u32 %v694, %v695
    %v697 = vshll.u32 2131351028, %v688
    %v698 = vshrl.u32 2102212464, %v689
    %v699 = vor.u32 %v697, %v698
    %v700 = vshll.u32 2102212464, %v688
    %v701 = vshrl.u32 920167782, %v689
    %v702 = vor.u32 %v700, %v701
    %v703 = vshll.u32 920167782, %v688
    %v704 = vshrl.u32 1326507024, %v689
    %v705 = vor.u32 %v703, %v704
    %vm706 = vcmp.lt.s32.totalorder %v687, 1
    %vm707 = vcmp.lt.s32.totalorder %v687, 2
    %vm708 = vcmp.lt.s32.totalorder %v687, 3
    %vm709 = vcmp.lt.s32.totalorder %v687, 4
    %v710 = vsel %vm706, %v690, %v693
    %v711 = vsel %vm709, %v699, 2102212464
    %v712 = vsel %vm708, %v696, %v711
    %v713 = vsel %vm707, %v710, %v712
    %v714 = vsel %vm706, %v693, %v696
    %v715 = vsel %vm709, %v702, 920167782
    %v716 = vsel %vm708, %v699, %v715
    %v717 = vsel %vm707, %v714, %v716
    %v718 = vsel %vm706, %v696, %v699
    %v719 = vsel %vm709, %v705, 1326507024
    %v720 = vsel %vm708, %v702, %v719
    %v721 = vsel %vm707, %v718, %v720
    %v722 = vshll.u32 %v682, 8
    %v723 = vmul.u32.u64.compose %v722, %v721
    %v724 = vextract.low.u32 %v723
    %v725 = vextract.high.u32 %v723
    %v726 = vmul.u32.u64.compose %v722, %v717
    %v727 = vextract.low.u32 %v726
    %v728 = vextract.high.u32 %v726
    %v729 = vmul.u32 %v722, %v713
    %v730 = vadd.s32 %v725, %v727
    %vm731 = vc.u32 %v725, %v727
    %v732 = vadd.s32 %v728, 1
    %v733 = vsel %vm731, %v732, %v728
    %v734 = vadd.s32 %v729, %v733
    %v735 = vadd.s32 %v734, 536870912
    %v736 = vshrl.u32 %v735, 30
    %v737 = vshll.u32 %v736, 30
    %v738 = vsub.s32 %v734, %v737
    %vm739 = vcmp.lt.s32.totalorder %v738, 0
    %v740 = vsub.s32 0, %v738
    %v741 = vsel %vm739, %v740, %v738
    %v742 = vclz %v741
    %v743 = vsub.s32 %v742, 2
    %vm744 = vcmp.gt.s32.totalorder 0, %v743
    %v745 = vsel %vm744, 0, %v743
    %v746 = vsub.s32 32, %v745
    %v747 = vshll.u32 %v738, %v745
    %v748 = vshrl.u32 %v730, %v746
    %v749 = vor.u32 %v747, %v748
    %v750 = vsub.s32 4294967266, %v745
    %v751 = vadd.s32 %v750, 127
    %v752 = vshll.u32 %v751, 23
    %v753 = vor.u32 4788187, %v752
    %v754 = vand.u32 2147483647, %v753
    %v756 = vcvt.s32.f32 %v749
    %v757 = vmul.f32 %v756, %v754
    %v758 = vxor.u32 %v757, 2147483648
    %v759 = vsel %vm676, %v758, %v757
    %v760 = vsub.s32 4, %v736
    %v761 = vsel %vm676, %v760, %v736
    %v762 = vsel %vm675, %v52, %v759
    %v763 = vsel %vm675, 0, %v761
    %v764 = vcosq.f32.pop %v762
    %v765 = vsinq.f32.pop %v762
    %vm766 = vweird.f32 %v52
    %v767 = vadd.s32 %v763, 3
    %v768 = vand.u32 %v767, 3
    %vm769 = vcmp.lt.s32.totalorder %v768, 2
    %vm770 = vcmp.eq.s32.totalorder %v768, 0
    %v771 = vxor.u32 %v765, 2147483648
    %v772 = vsel %vm770, %v764, %v771
    %vm773 = vcmp.eq.s32.totalorder %v768, 2
    %v774 = vxor.u32 %v764, 2147483648
    %v775 = vsel %vm773, %v774, %v765
    %v776 = vsel %vm769, %v772, %v775
    %v777 = vsel %vm766, nan, %v776
    %v778 = vand.u32 2147483647, %v53
    %vm779 = vcmp.le.f32.partialorder %v778, 0.7853982
    %vm780 = vcmp.lt.s32.totalorder %v53, 0
    %v781 = vand.u32 %v53, 2139095040
    %v782 = vshrl.u32 %v781, 23
    %v783 = vsub.s32 %v782, 127
    %v784 = vand.u32 2147483647, %v53
    %v785 = vand.u32 %v784, 8388607
    %v786 = vor.u32 %v785, 8388608
    %v787 = vsub.s32 0, %v786
    %v788 = vadd.s32 %v783, 1
    %vm789 = vcmp.gt.s32.totalorder %v788, 0
    %v790 = vsel %vm789, %v788, 0
    %v791 = vshrl.u32 %v790, 5
    %v792 = vand.u32 %v790, 31
    %v793 = vsub.s32 32, %v792
    %v794 = vshrl.u32 683565275, %v793
    %v795 = vshll.u32 683565275, %v792
    %v796 = vshrl.u32 2475754826, %v793
    %v797 = vor.u32 %v795, %v796
    %v798 = vshll.u32 2475754826, %v792
    %v799 = vshrl.u32 2131351028, %v793
    %v800 = vor.u32 %v798, %v799
    %v801 = vshll.u32 2131351028, %v792
    %v802 = vshrl.u32 2102212464, %v793
    %v803 = vor.u32 %v801, %v802
    %v804 = vshll.u32 2102212464, %v792
    %v805 = vshrl.u32 920167782, %v793
    %v806 = vor.u32 %v804, %v805
    %v807 = vshll.u32 920167782, %v792
    %v808 = vshrl.u32 1326507024, %v793
    %v809 = vor.u32 %v807, %v808
    %vm810 = vcmp.lt.s32.totalorder %v791, 1
    %vm811 = vcmp.lt.s32.totalorder %v791, 2
    %vm812 = vcmp.lt.s32.totalorder %v791, 3
    %vm813 = vcmp.lt.s32.totalorder %v791, 4
    %v814 = vsel %vm810, %v794, %v797
    %v815 = vsel %vm813, %v803, 2102212464
    %v816 = vsel %vm812, %v800, %v815
    %v817 = vsel %vm811, %v814, %v816
    %v818 = vsel %vm810, %v797, %v800
    %v819 = vsel %vm813, %v806, 920167782
    %v820 = vsel %vm812, %v803, %v819
    %v821 = vsel %vm811, %v818, %v820
    %v822 = vsel %vm810, %v800, %v803
    %v823 = vsel %vm813, %v809, 1326507024
    %v824 = vsel %vm812, %v806, %v823
    %v825 = vsel %vm811, %v822, %v824
    %v826 = vshll.u32 %v786, 8
    %v827 = vmul.u32.u64.compose %v826, %v825
    %v828 = vextract.low.u32 %v827
    %v829 = vextract.high.u32 %v827
    %v830 = vmul.u32.u64.compose %v826, %v821
    %v831 = vextract.low.u32 %v830
    %v832 = vextract.high.u32 %v830
    %v833 = vmul.u32 %v826, %v817
    %v834 = vadd.s32 %v829, %v831
    %vm835 = vc.u32 %v829, %v831
    %v836 = vadd.s32 %v832, 1
    %v837 = vsel %vm835, %v836, %v832
    %v838 = vadd.s32 %v833, %v837
    %v839 = vadd.s32 %v838, 536870912
    %v840 = vshrl.u32 %v839, 30
    %v841 = vshll.u32 %v840, 30
    %v842 = vsub.s32 %v838, %v841
    %vm843 = vcmp.lt.s32.totalorder %v842, 0
    %v844 = vsub.s32 0, %v842
    %v845 = vsel %vm843, %v844, %v842
    %v846 = vclz %v845
    %v847 = vsub.s32 %v846, 2
    %vm848 = vcmp.gt.s32.totalorder 0, %v847
    %v849 = vsel %vm848, 0, %v847
    %v850 = vsub.s32 32, %v849
    %v851 = vshll.u32 %v842, %v849
    %v852 = vshrl.u32 %v834, %v850
    %v853 = vor.u32 %v851, %v852
    %v854 = vsub.s32 4294967266, %v849
    %v855 = vadd.s32 %v854, 127
    %v856 = vshll.u32 %v855, 23
    %v857 = vor.u32 4788187, %v856
    %v858 = vand.u32 2147483647, %v857
    %v860 = vcvt.s32.f32 %v853
    %v861 = vmul.f32 %v860, %v858
    %v862 = vxor.u32 %v861, 2147483648
    %v863 = vsel %vm780, %v862, %v861
    %v864 = vsub.s32 4, %v840
    %v865 = vsel %vm780, %v864, %v840
    %v866 = vsel %vm779, %v53, %v863
    %v867 = vsel %vm779, 0, %v865
    %v868 = vcosq.f32.pop %v866
    %v869 = vsinq.f32.pop %v866
    %vm870 = vweird.f32 %v53
    %v871 = vadd.s32 %v867, 3
    %v872 = vand.u32 %v871, 3
    %vm873 = vcmp.lt.s32.totalorder %v872, 2
    %vm874 = vcmp.eq.s32.totalorder %v872, 0
    %v875 = vxor.u32 %v869, 2147483648
    %v876 = vsel %vm874, %v868, %v875
    %vm877 = vcmp.eq.s32.totalorder %v872, 2
    %v878 = vxor.u32 %v868, 2147483648
    %v879 = vsel %vm877, %v878, %v869
    %v880 = vsel %vm873, %v876, %v879
    %v881 = vsel %vm870, nan, %v880
    %882 = vrot.lane.b32.xlu0 %v15, 127
    %v883 = vpop.permute.xlu0 %882
    %884 = vrot.lane.b32.xlu0 %v16, 127
    %v885 = vpop.permute.xlu0 %884
    %886 = vrot.lane.b32.xlu0 %v17, 127
    %v887 = vpop.permute.xlu0 %886
    %888 = vrot.lane.b32.xlu0 %v18, 127
    %v889 = vpop.permute.xlu0 %888
    %890 = vrot.lane.b32.xlu0 %v15, 1
    %v891 = vpop.permute.xlu0 %890
    %892 = vrot.lane.b32.xlu0 %v16, 1
    %v893 = vpop.permute.xlu0 %892
    %894 = vrot.lane.b32.xlu0 %v17, 1
    %v895 = vpop.permute.xlu0 %894
    %896 = vrot.lane.b32.xlu0 %v18, 1
    %v897 = vpop.permute.xlu0 %896
    %vm898 = vcmp.lt.f32.partialorder %v19, 0.0
    %v899 = vsel %vm898, 1, 0
    %v900 = vlaneseq
    %v901 = vshrl.u32 %v900, 7
    %v902 = vsub.s32 0, %v901
    %v903 = vrot.slane %v899, %v902
    %vm904 = vcmp.eq.s32.totalorder %v903, 1
    %v905 = vsel %vm904, %v883, %v891
    %v906 = vsel %vm904, %v885, %v893
    %v907 = vsel %vm904, %v887, %v895
    %v908 = vsel %vm904, %v889, %v897
    %v909 = vmul.f32 %v15, %v156
    %v910 = vmul.f32 %v16, %v259
    %v911 = vmul.f32 %v17, %v362
    %v912 = vmul.f32 %v18, %v465
    %v913 = vmul.f32 %v905, %v569
    %v914 = vmul.f32 %v906, %v673
    %v915 = vmul.f32 %v907, %v777
    %v916 = vmul.f32 %v908, %v881
    %v917 = vadd.f32 %v909, %v913
    %v918 = vadd.f32 %v910, %v914
    %v919 = vadd.f32 %v911, %v915
    %v920 = vadd.f32 %v912, %v916
    %921 = vst [vmem:[#allocation2] sm:$0xff] %v917
    %922 = vst [vmem:[#allocation2 + $0x8] sm:$0xff] %v918
    %923 = vst [vmem:[#allocation2 + $0x10] sm:$0xff] %v919
    %924 = vst [vmem:[#allocation2 + $0x18] sm:$0xff] %v920
    // Predicated region
    $region14: #{tpu_custom_call.1} parent=1 // pred_check
      _
    $region15: #{tpu_custom_call.1} parent=1 // pred_check_branch
      %926 = sbr.rel (0) target = $region17
    $region16: #{tpu_custom_call.1} parent=1 // pred_region
      %s928 = ssub.s32 512, 512
      %929 = vsyncadd [#allocation3], %s928
      %s930 = sshll.u32 [#allocation2], 4
      %s931 = int_to_ptr.vmem [resolvable:$true] %s930
      %936 = dma.vmem_to_hbm [thread:$0]  %s931, 512, %s3, [#allocation3], 128, 128, 8
    $region17: #{tpu_custom_call.1} parent=1 // pred_fallthru
      _
    // Predicated region
    $region18: #{tpu_custom_call.1} parent=1 // pred_check
      _
    $region19: #{tpu_custom_call.1} parent=1 // pred_check_branch
      %938 = sbr.rel (0) target = $region21
    $region20: #{tpu_custom_call.1} parent=1 // pred_region
      %939 = dma.done [#allocation3], 512
    $region21: #{tpu_custom_call.1} parent=1 // pred_fallthru
      _
    %940 = vsyncpa [#allocation3], 1

</llo_original>
